<compile_context>
chip_gen: v6e
topology: v6e:2x2x1
jax: 0.10.0
libtpu: 0.0.40
codegen_flags: <defaults>
</compile_context>

<pallas_src>
import functools

import jax
import jax.numpy as jnp
from jax.experimental import pallas as pl
from jax.experimental.pallas import tpu as pltpu

D_IN, H1, H2, D_OUT = 784, 150, 150, 10


def _round_up(n, m):
    return ((n + m - 1) // m) * m


def _cdiv(a, b):
    return (a + b - 1) // b


H_PAD = _round_up(max(H1, H2), 128)   # 256
O_PAD = _round_up(D_OUT, 128)         # 128


def _pad2d(a, rows=None, cols=None):
    """Zero-pad a 2-D array on the bottom/right (no-op if already the right size)."""
    r, c = a.shape
    pr = 0 if rows is None else rows - r
    pc = 0 if cols is None else cols - c
    if pr == 0 and pc == 0:
        return a
    return jnp.pad(a, ((0, pr), (0, pc)))


# ----------------------------- Pallas kernel (hot path) -----------------------------

def _mlp3_kernel(x_ref, w1_ref, b1_ref, w2_ref, b2_ref, w3_ref, b3_ref, o_ref):
    # Cast the streamed f32 activations to bf16 on the VPU (one f32 HBM read of x,
    # instead of read-f32 + write-bf16 + read-bf16 via a wrapper pre-pass).
    x = x_ref[...].astype(jnp.bfloat16)
    # fc1 + ReLU  (MXU matmul, f32 accumulation; bias+ReLU on the VPU in f32)
    h = jnp.dot(x, w1_ref[...], preferred_element_type=jnp.float32)
    h = jnp.maximum(h + b1_ref[...], 0.0)
    # fc2 + ReLU
    h = jnp.dot(h.astype(jnp.bfloat16), w2_ref[...], preferred_element_type=jnp.float32)
    h = jnp.maximum(h + b2_ref[...], 0.0)
    # fc3 (no activation)
    o = jnp.dot(h.astype(jnp.bfloat16), w3_ref[...], preferred_element_type=jnp.float32)
    o_ref[...] = (o + b3_ref[...]).astype(o_ref.dtype)


# ----------------------------- wrapper -----------------------------------------------

def _choose_tm(m_rows, tm):
    """Row tile: multiple of 16, <= tm, and >= 2 grid steps when the batch is big
    enough (so the "parallel" grid axis can use both TensorCores on v7x)."""
    if m_rows <= tm:
        if m_rows >= 512:                       # worth splitting across 2 TCs
            return _round_up(_cdiv(m_rows, 2), 16)
        return m_rows                           # single small tile
    return min(tm, max(256, _round_up(_cdiv(m_rows, 2), 16)))


@functools.partial(jax.jit, static_argnames=("tm",))
def mnist_2nn_forward(params, inputs, *, tm=1024):
    """inputs: (..., 784) -> logits (M, 10). Matches MNIST_2NN.forward semantics."""
    x = inputs.reshape(-1, D_IN).astype(jnp.float32)
    M = x.shape[0]

    Mr = _round_up(M, 16)          # bf16 sublane-friendly; at most 15 padded rows
    TM = _choose_tm(Mr, tm)
    grid = (_cdiv(Mr, TM),)        # ragged last block handled by Pallas; rows are
                                   # independent, so pad/garbage rows are exact after
                                   # the final out[:M] slice (no in-kernel row reduce).

    xr = _pad2d(x, rows=Mr)        # no copy when M is already a multiple of 16

    # Weights / biases: zero-padded lane-dense (exact), bf16 for the MXU. Tiny one-time cost.
    w1 = _pad2d(params["fc1_w"], cols=H_PAD).astype(jnp.bfloat16)                  # (784, 256)
    b1 = _pad2d(params["fc1_b"].reshape(1, -1), cols=H_PAD).astype(jnp.float32)    # (1, 256)
    w2 = _pad2d(params["fc2_w"], rows=H_PAD, cols=H_PAD).astype(jnp.bfloat16)      # (256, 256)
    b2 = _pad2d(params["fc2_b"].reshape(1, -1), cols=H_PAD).astype(jnp.float32)    # (1, 256)
    w3 = _pad2d(params["fc3_w"], rows=H_PAD, cols=O_PAD).astype(jnp.bfloat16)      # (256, 128)
    b3 = _pad2d(params["fc3_b"].reshape(1, -1), cols=O_PAD).astype(jnp.float32)    # (1, 128)

    out = pl.pallas_call(
        _mlp3_kernel,
        grid=grid,
        in_specs=[
            # streamed activations: full-extent K (=784) last dim, f32, one row-tile per step
            pl.BlockSpec((TM, D_IN), lambda i: (i, 0)),
            # weights / biases: constant index_map -> VMEM-resident across the grid
            pl.BlockSpec((D_IN, H_PAD), lambda i: (0, 0)),
            pl.BlockSpec((1, H_PAD), lambda i: (0, 0)),
            pl.BlockSpec((H_PAD, H_PAD), lambda i: (0, 0)),
            pl.BlockSpec((1, H_PAD), lambda i: (0, 0)),
            pl.BlockSpec((H_PAD, O_PAD), lambda i: (0, 0)),
            pl.BlockSpec((1, O_PAD), lambda i: (0, 0)),
        ],
        out_specs=pl.BlockSpec((TM, O_PAD), lambda i: (i, 0)),
        # bf16 logits halve the (lane-amplified) output stream; upcast after the slice.
        out_shape=jax.ShapeDtypeStruct((Mr, O_PAD), jnp.bfloat16),
        compiler_params=pltpu.CompilerParams(
            dimension_semantics=("parallel",),        # both TCs on v7x; harmless elsewhere
            vmem_limit_bytes=48 * 1024 * 1024,        # headroom up to TM=2048 on all gens
        ),
    )(xr, w1, b1, w2, b2, w3, b3)

    # Drop padded rows / output columns (exact) and restore f32 logits.
    return out[:M, :D_OUT].astype(jnp.float32)


# ----------------------------- params ------------------------------------------------

def init_params(key):
    """Deterministic init; shapes match nn.Linear(784,150)/(150,150)/(150,10)."""
    ks = jax.random.split(key, 6)

    def u(k, shape, fan_in):
        bound = 1.0 / (fan_in ** 0.5)
        return jax.random.uniform(k, shape, jnp.float32, -bound, bound)

    return {
        "fc1_w": u(ks[0], (D_IN, H1), D_IN),   # torch (150,784) stored transposed as (in,out)
        "fc1_b": u(ks[1], (H1,), D_IN),
        "fc2_w": u(ks[2], (H1, H2), H1),
        "fc2_b": u(ks[3], (H2,), H1),
        "fc3_w": u(ks[4], (H2, D_OUT), H2),
        "fc3_b": u(ks[5], (D_OUT,), H2),
    }


if __name__ == "__main__":
    key = jax.random.PRNGKey(0)
    pkey, xkey = jax.random.split(key)
    params = init_params(pkey)
    x = jax.random.normal(xkey, (2, D_IN), jnp.float32)   # batch=2 flattened MNIST images

    out = mnist_2nn_forward(params, x)
    out = jax.block_until_ready(out)
    assert out.shape == (2, D_OUT) and out.dtype == jnp.float32

    # Sanity check against a pure-JAX f32 reference (loose tolerance: bf16 MXU inputs).
    def ref(p, xx):
        h = jnp.maximum(xx @ p["fc1_w"] + p["fc1_b"], 0.0)
        h = jnp.maximum(h @ p["fc2_w"] + p["fc2_b"], 0.0)
        return h @ p["fc3_w"] + p["fc3_b"]

    r = jax.block_until_ready(ref(params, x))
    assert float(jnp.max(jnp.abs(out - r))) < 0.1, "kernel output mismatch vs reference"

    print("KERNEL_OK")
</pallas_src>

<mosaic_0001>
module attributes {stable_mosaic.version = 11 : i64} {
  func.func @_mlp3_kernel(%arg0: i32, %arg1: memref<16x784xf32, #tpu.memory_space<vmem>>, %arg2: memref<784x256xbf16, #tpu.memory_space<vmem>>, %arg3: memref<1x256xf32, #tpu.memory_space<vmem>>, %arg4: memref<256x256xbf16, #tpu.memory_space<vmem>>, %arg5: memref<1x256xf32, #tpu.memory_space<vmem>>, %arg6: memref<256x128xbf16, #tpu.memory_space<vmem>>, %arg7: memref<1x128xf32, #tpu.memory_space<vmem>>, %arg8: memref<16x128xbf16, #tpu.memory_space<vmem>>) attributes {dimension_semantics = [#tpu.dimension_semantics<parallel>], iteration_bounds = array<i64: 1>, scalar_prefetch = 0 : i64, scratch_operands = 0 : i64, tpu.core_type = #tpu.core_type<tc>, window_params = [{transform_indices = @transform_0, window_bounds = array<i64: 16, 784>}, {pipeline_mode = #tpu.pipeline_mode<synchronous>, transform_indices = @transform_1, window_bounds = array<i64: 784, 256>}, {pipeline_mode = #tpu.pipeline_mode<synchronous>, transform_indices = @transform_2, window_bounds = array<i64: 1, 256>}, {pipeline_mode = #tpu.pipeline_mode<synchronous>, transform_indices = @transform_3, window_bounds = array<i64: 256, 256>}, {pipeline_mode = #tpu.pipeline_mode<synchronous>, transform_indices = @transform_4, window_bounds = array<i64: 1, 256>}, {pipeline_mode = #tpu.pipeline_mode<synchronous>, transform_indices = @transform_5, window_bounds = array<i64: 256, 128>}, {pipeline_mode = #tpu.pipeline_mode<synchronous>, transform_indices = @transform_6, window_bounds = array<i64: 1, 128>}, {transform_indices = @transform_7, window_bounds = array<i64: 16, 128>}]} {
    %c0 = arith.constant 0 : index
    %c0_0 = arith.constant 0 : index
    %0 = vector.load %arg1[%c0, %c0_0] : memref<16x784xf32, #tpu.memory_space<vmem>>, vector<16x784xf32>
    %1 = arith.truncf %0 : vector<16x784xf32> to vector<16x784xbf16>
    %c0_1 = arith.constant 0 : index
    %c0_2 = arith.constant 0 : index
    %2 = vector.load %arg2[%c0_1, %c0_2] : memref<784x256xbf16, #tpu.memory_space<vmem>>, vector<784x256xbf16>
    %cst = arith.constant dense<0.000000e+00> : vector<16x256xf32>
    %3 = tpu.matmul %1, %2, %cst {dimension_numbers = #tpu.dot_dimension_numbers<[1], [0], [0], [1], [0, 0, 1, 1], [], []>} : vector<16x784xbf16>, vector<784x256xbf16>, vector<16x256xf32> -> vector<16x256xf32>
    %c0_3 = arith.constant 0 : index
    %c0_4 = arith.constant 0 : index
    %4 = vector.load %arg3[%c0_3, %c0_4] : memref<1x256xf32, #tpu.memory_space<vmem>>, vector<1x256xf32>
    %5 = vector.broadcast %4 : vector<1x256xf32> to vector<16x256xf32>
    %6 = arith.addf %3, %5 : vector<16x256xf32>
    %cst_5 = arith.constant 0.000000e+00 : f32
    %7 = vector.broadcast %cst_5 : f32 to vector<16x256xf32>
    %8 = arith.maximumf %6, %7 : vector<16x256xf32>
    %9 = arith.truncf %8 : vector<16x256xf32> to vector<16x256xbf16>
    %c0_6 = arith.constant 0 : index
    %c0_7 = arith.constant 0 : index
    %10 = vector.load %arg4[%c0_6, %c0_7] : memref<256x256xbf16, #tpu.memory_space<vmem>>, vector<256x256xbf16>
    %cst_8 = arith.constant dense<0.000000e+00> : vector<16x256xf32>
    %11 = tpu.matmul %9, %10, %cst_8 {dimension_numbers = #tpu.dot_dimension_numbers<[1], [0], [0], [1], [0, 0, 1, 1], [], []>} : vector<16x256xbf16>, vector<256x256xbf16>, vector<16x256xf32> -> vector<16x256xf32>
    %c0_9 = arith.constant 0 : index
    %c0_10 = arith.constant 0 : index
    %12 = vector.load %arg5[%c0_9, %c0_10] : memref<1x256xf32, #tpu.memory_space<vmem>>, vector<1x256xf32>
    %13 = vector.broadcast %12 : vector<1x256xf32> to vector<16x256xf32>
    %14 = arith.addf %11, %13 : vector<16x256xf32>
    %cst_11 = arith.constant 0.000000e+00 : f32
    %15 = vector.broadcast %cst_11 : f32 to vector<16x256xf32>
    %16 = arith.maximumf %14, %15 : vector<16x256xf32>
    %17 = arith.truncf %16 : vector<16x256xf32> to vector<16x256xbf16>
    %c0_12 = arith.constant 0 : index
    %c0_13 = arith.constant 0 : index
    %18 = vector.load %arg6[%c0_12, %c0_13] : memref<256x128xbf16, #tpu.memory_space<vmem>>, vector<256x128xbf16>
    %cst_14 = arith.constant dense<0.000000e+00> : vector<16x128xf32>
    %19 = tpu.matmul %17, %18, %cst_14 {dimension_numbers = #tpu.dot_dimension_numbers<[1], [0], [0], [1], [0, 0, 1, 1], [], []>} : vector<16x256xbf16>, vector<256x128xbf16>, vector<16x128xf32> -> vector<16x128xf32>
    %c0_15 = arith.constant 0 : index
    %c0_16 = arith.constant 0 : index
    %20 = vector.load %arg7[%c0_15, %c0_16] : memref<1x128xf32, #tpu.memory_space<vmem>>, vector<1x128xf32>
    %21 = vector.broadcast %20 : vector<1x128xf32> to vector<16x128xf32>
    %22 = arith.addf %19, %21 : vector<16x128xf32>
    %23 = arith.truncf %22 : vector<16x128xf32> to vector<16x128xbf16>
    %c0_17 = arith.constant 0 : index
    %c0_18 = arith.constant 0 : index
    %24 = vector.load %arg8[%c0_17, %c0_18] : memref<16x128xbf16, #tpu.memory_space<vmem>>, vector<16x128xbf16>
    tpu.vector_store %arg8[%c0_17, %c0_18], %23 {strides = array<i32>} : memref<16x128xbf16, #tpu.memory_space<vmem>>, vector<16x128xbf16>,
    return
  }
  func.func @transform_0(%arg0: i32) -> (i32, i32) {
    %c0_i32 = arith.constant 0 : i32
    %c0_i32_0 = arith.constant 0 : i32
    return %arg0, %c0_i32 : i32, i32
  }
  func.func @transform_1(%arg0: i32) -> (i32, i32) {
    %c0_i32 = arith.constant 0 : i32
    %c0_i32_0 = arith.constant 0 : i32
    %c0_i32_1 = arith.constant 0 : i32
    return %c0_i32, %c0_i32_0 : i32, i32
  }
  func.func @transform_2(%arg0: i32) -> (i32, i32) {
    %c0_i32 = arith.constant 0 : i32
    %c0_i32_0 = arith.constant 0 : i32
    %c0_i32_1 = arith.constant 0 : i32
    return %c0_i32, %c0_i32_0 : i32, i32
  }
  func.func @transform_3(%arg0: i32) -> (i32, i32) {
    %c0_i32 = arith.constant 0 : i32
    %c0_i32_0 = arith.constant 0 : i32
    %c0_i32_1 = arith.constant 0 : i32
    return %c0_i32, %c0_i32_0 : i32, i32
  }
  func.func @transform_4(%arg0: i32) -> (i32, i32) {
    %c0_i32 = arith.constant 0 : i32
    %c0_i32_0 = arith.constant 0 : i32
    %c0_i32_1 = arith.constant 0 : i32
    return %c0_i32, %c0_i32_0 : i32, i32
  }
  func.func @transform_5(%arg0: i32) -> (i32, i32) {
    %c0_i32 = arith.constant 0 : i32
    %c0_i32_0 = arith.constant 0 : i32
    %c0_i32_1 = arith.constant 0 : i32
    return %c0_i32, %c0_i32_0 : i32, i32
  }
  func.func @transform_6(%arg0: i32) -> (i32, i32) {
    %c0_i32 = arith.constant 0 : i32
    %c0_i32_0 = arith.constant 0 : i32
    %c0_i32_1 = arith.constant 0 : i32
    return %c0_i32, %c0_i32_0 : i32, i32
  }
  func.func @transform_7(%arg0: i32) -> (i32, i32) {
    %c0_i32 = arith.constant 0 : i32
    %c0_i32_0 = arith.constant 0 : i32
    return %arg0, %c0_i32 : i32, i32
  }
}

</mosaic_0001>

<llo_original>
// kernel: mnist_2nn_forward.1
$region0: #{mnist_2nn_forward.1}
  #allocation0 [shape = 'u32[]', space=smem, size = 0x4, offset = 0x4, fixed_abs, tag = 'smem constant byte address 0x4 - core index']
  #allocation1 [shape = 'u32[144,128]{1,0:T(1,128)}', space=vmem, size = 0x12000, scoped, tag = 'internal scratch']
  %s0 = inlined_call_operand.vmem [shape: f32[16,784], index: 0, kind: input, shape index: {}]
  %s1 = inlined_call_operand.vmem [shape: bf16[784,256], index: 1, kind: input, shape index: {}]
  %s2 = inlined_call_operand.vmem [shape: f32[1,256], index: 2, kind: input, shape index: {}]
  %s3 = inlined_call_operand.vmem [shape: bf16[256,256], index: 3, kind: input, shape index: {}]
  %s4 = inlined_call_operand.vmem [shape: f32[1,256], index: 4, kind: input, shape index: {}]
  %s5 = inlined_call_operand.vmem [shape: bf16[256,128], index: 5, kind: input, shape index: {}]
  %s6 = inlined_call_operand.vmem [shape: f32[1,128], index: 6, kind: input, shape index: {}]
  %s7 = inlined_call_operand.vmem [shape: bf16[16,128], index: 7, kind: output, shape index: {}]
  %s8 = sld [smem:[#allocation0]]
  $region38: #{mnist_2nn_forward.1} parent=0
    _
  %s10 = ssub.s32 1, %s8
  %s11 = scalar_select 0, %s10, %s8
  // Predicated region
  $region2: #{mnist_2nn_forward.1} parent=0 // pred_check
    _
  $region3: #{mnist_2nn_forward.1} parent=0 // pred_check_branch
    %13 = sbr.rel (0) target = $region5
  $region4: #{mnist_2nn_forward.1} parent=0 // pred_region
    _
  $region5: #{mnist_2nn_forward.1} parent=0 // pred_fallthru
    _
  // Predicated region
  $region6: #{mnist_2nn_forward.1} parent=0 // pred_check
    _
  $region7: #{mnist_2nn_forward.1} parent=0 // pred_check_branch
    %15 = sbr.rel (0) target = $region9
  $region8: #{mnist_2nn_forward.1} parent=0 // pred_region
    _
  $region9: #{mnist_2nn_forward.1} parent=0 // pred_fallthru
    _
  // Predicated region
  $region10: #{mnist_2nn_forward.1} parent=0 // pred_check
    _
  $region11: #{mnist_2nn_forward.1} parent=0 // pred_check_branch
    %17 = sbr.rel (0) target = $region13
  $region12: #{mnist_2nn_forward.1} parent=0 // pred_region
    _
  $region13: #{mnist_2nn_forward.1} parent=0 // pred_fallthru
    _
  // Predicated region
  $region14: #{mnist_2nn_forward.1} parent=0 // pred_check
    _
  $region15: #{mnist_2nn_forward.1} parent=0 // pred_check_branch
    %19 = sbr.rel (0) target = $region17
  $region16: #{mnist_2nn_forward.1} parent=0 // pred_region
    _
  $region17: #{mnist_2nn_forward.1} parent=0 // pred_fallthru
    _
  // Predicated region
  $region18: #{mnist_2nn_forward.1} parent=0 // pred_check
    _
  $region19: #{mnist_2nn_forward.1} parent=0 // pred_check_branch
    %21 = sbr.rel (0) target = $region21
  $region20: #{mnist_2nn_forward.1} parent=0 // pred_region
    _
  $region21: #{mnist_2nn_forward.1} parent=0 // pred_fallthru
    _
  // Predicated region
  $region22: #{mnist_2nn_forward.1} parent=0 // pred_check
    _
  $region23: #{mnist_2nn_forward.1} parent=0 // pred_check_branch
    %23 = sbr.rel (0) target = $region25
  $region24: #{mnist_2nn_forward.1} parent=0 // pred_region
    _
  $region25: #{mnist_2nn_forward.1} parent=0 // pred_fallthru
    _
  // Predicated region
  $region26: #{mnist_2nn_forward.1} parent=0 // pred_check
    _
  $region27: #{mnist_2nn_forward.1} parent=0 // pred_check_branch
    %25 = sbr.rel (0) target = $region29
  $region28: #{mnist_2nn_forward.1} parent=0 // pred_region
    _
  $region29: #{mnist_2nn_forward.1} parent=0 // pred_fallthru
    _
  %v27 = vld [vmem:[%s0] sm:$0xff]
  %v28 = vld [vmem:[%s0 + $0x8] sm:$0xff]
  %v29 = vld [vmem:[%s0 + $0x10] sm:$0xff]
  %v30 = vld [vmem:[%s0 + $0x18] sm:$0xff]
  %v31 = vld [vmem:[%s0 + $0x20] sm:$0xff]
  %v32 = vld [vmem:[%s0 + $0x28] sm:$0xff]
  %v33 = vld [vmem:[%s0 + $0x30] sm:$0xff]
  %v34 = vld [vmem:[%s0 + $0x38] sm:$0xff]
  %v35 = vld [vmem:[%s0 + $0x40] sm:$0xff]
  %v36 = vld [vmem:[%s0 + $0x48] sm:$0xff]
  %v37 = vld [vmem:[%s0 + $0x50] sm:$0xff]
  %v38 = vld [vmem:[%s0 + $0x58] sm:$0xff]
  %v39 = vld [vmem:[%s0 + $0x60] sm:$0xff]
  %v40 = vld [vmem:[%s0 + $0x68] sm:$0xff]
  %v41 = vpack.c.bf16 %v34, %v27
  %v42 = vpack.c.bf16 %v35, %v28
  %v43 = vpack.c.bf16 %v36, %v29
  %v44 = vpack.c.bf16 %v37, %v30
  %v45 = vpack.c.bf16 %v38, %v31
  %v46 = vpack.c.bf16 %v39, %v32
  %v47 = vpack.c.bf16 %v40, %v33
  %v48 = vld [vmem:[%s1] sm:$0xff]
  %v49 = vld [vmem:[%s1 + $0x8] sm:$0xff]
  %v50 = vld [vmem:[%s1 + $0x10] sm:$0xff]
  %v51 = vld [vmem:[%s1 + $0x18] sm:$0xff]
  %v52 = vld [vmem:[%s1 + $0x20] sm:$0xff]
  %v53 = vld [vmem:[%s1 + $0x28] sm:$0xff]
  %v54 = vld [vmem:[%s1 + $0x30] sm:$0xff]
  %v55 = vld [vmem:[%s1 + $0x38] sm:$0xff]
  %v56 = vld [vmem:[%s1 + $0x40] sm:$0xff]
  %v57 = vld [vmem:[%s1 + $0x48] sm:$0xff]
  %v58 = vld [vmem:[%s1 + $0x50] sm:$0xff]
  %v59 = vld [vmem:[%s1 + $0x58] sm:$0xff]
  %v60 = vld [vmem:[%s1 + $0x60] sm:$0xff]
  %v61 = vld [vmem:[%s1 + $0x68] sm:$0xff]
  %v62 = vld [vmem:[%s1 + $0x70] sm:$0xff]
  %v63 = vld [vmem:[%s1 + $0x78] sm:$0xff]
  %v64 = vld [vmem:[%s1 + $0x80] sm:$0xff]
  %v65 = vld [vmem:[%s1 + $0x88] sm:$0xff]
  %v66 = vld [vmem:[%s1 + $0x90] sm:$0xff]
  %v67 = vld [vmem:[%s1 + $0x98] sm:$0xff]
  %v68 = vld [vmem:[%s1 + $0xa0] sm:$0xff]
  %v69 = vld [vmem:[%s1 + $0xa8] sm:$0xff]
  %v70 = vld [vmem:[%s1 + $0xb0] sm:$0xff]
  %v71 = vld [vmem:[%s1 + $0xb8] sm:$0xff]
  %v72 = vld [vmem:[%s1 + $0xc0] sm:$0xff]
  %v73 = vld [vmem:[%s1 + $0xc8] sm:$0xff]
  %v74 = vld [vmem:[%s1 + $0xd0] sm:$0xff]
  %v75 = vld [vmem:[%s1 + $0xd8] sm:$0xff]
  %v76 = vld [vmem:[%s1 + $0xe0] sm:$0xff]
  %v77 = vld [vmem:[%s1 + $0xe8] sm:$0xff]
  %v78 = vld [vmem:[%s1 + $0xf0] sm:$0xff]
  %v79 = vld [vmem:[%s1 + $0xf8] sm:$0xff]
  %v80 = vld [vmem:[%s1 + $0x100] sm:$0xff]
  %v81 = vld [vmem:[%s1 + $0x108] sm:$0xff]
  %v82 = vld [vmem:[%s1 + $0x110] sm:$0xff]
  %v83 = vld [vmem:[%s1 + $0x118] sm:$0xff]
  %v84 = vld [vmem:[%s1 + $0x120] sm:$0xff]
  %v85 = vld [vmem:[%s1 + $0x128] sm:$0xff]
  %v86 = vld [vmem:[%s1 + $0x130] sm:$0xff]
  %v87 = vld [vmem:[%s1 + $0x138] sm:$0xff]
  %v88 = vld [vmem:[%s1 + $0x140] sm:$0xff]
  %v89 = vld [vmem:[%s1 + $0x148] sm:$0xff]
  %v90 = vld [vmem:[%s1 + $0x150] sm:$0xff]
  %v91 = vld [vmem:[%s1 + $0x158] sm:$0xff]
  %v92 = vld [vmem:[%s1 + $0x160] sm:$0xff]
  %v93 = vld [vmem:[%s1 + $0x168] sm:$0xff]
  %v94 = vld [vmem:[%s1 + $0x170] sm:$0xff]
  %v95 = vld [vmem:[%s1 + $0x178] sm:$0xff]
  %v96 = vld [vmem:[%s1 + $0x180] sm:$0xff]
  %v97 = vld [vmem:[%s1 + $0x188] sm:$0xff]
  %v98 = vld [vmem:[%s1 + $0x190] sm:$0xff]
  %v99 = vld [vmem:[%s1 + $0x198] sm:$0xff]
  %v100 = vld [vmem:[%s1 + $0x1a0] sm:$0xff]
  %v101 = vld [vmem:[%s1 + $0x1a8] sm:$0xff]
  %v102 = vld [vmem:[%s1 + $0x1b0] sm:$0xff]
  %v103 = vld [vmem:[%s1 + $0x1b8] sm:$0xff]
  %v104 = vld [vmem:[%s1 + $0x1c0] sm:$0xff]
  %v105 = vld [vmem:[%s1 + $0x1c8] sm:$0xff]
  %v106 = vld [vmem:[%s1 + $0x1d0] sm:$0xff]
  %v107 = vld [vmem:[%s1 + $0x1d8] sm:$0xff]
  %v108 = vld [vmem:[%s1 + $0x1e0] sm:$0xff]
  %v109 = vld [vmem:[%s1 + $0x1e8] sm:$0xff]
  %v110 = vld [vmem:[%s1 + $0x1f0] sm:$0xff]
  %v111 = vld [vmem:[%s1 + $0x1f8] sm:$0xff]
  %v112 = vld [vmem:[%s1 + $0x200] sm:$0xff]
  %v113 = vld [vmem:[%s1 + $0x208] sm:$0xff]
  %v114 = vld [vmem:[%s1 + $0x210] sm:$0xff]
  %v115 = vld [vmem:[%s1 + $0x218] sm:$0xff]
  %v116 = vld [vmem:[%s1 + $0x220] sm:$0xff]
  %v117 = vld [vmem:[%s1 + $0x228] sm:$0xff]
  %v118 = vld [vmem:[%s1 + $0x230] sm:$0xff]
  %v119 = vld [vmem:[%s1 + $0x238] sm:$0xff]
  %v120 = vld [vmem:[%s1 + $0x240] sm:$0xff]
  %v121 = vld [vmem:[%s1 + $0x248] sm:$0xff]
  %v122 = vld [vmem:[%s1 + $0x250] sm:$0xff]
  %v123 = vld [vmem:[%s1 + $0x258] sm:$0xff]
  %v124 = vld [vmem:[%s1 + $0x260] sm:$0xff]
  %v125 = vld [vmem:[%s1 + $0x268] sm:$0xff]
  %v126 = vld [vmem:[%s1 + $0x270] sm:$0xff]
  %v127 = vld [vmem:[%s1 + $0x278] sm:$0xff]
  %v128 = vld [vmem:[%s1 + $0x280] sm:$0xff]
  %v129 = vld [vmem:[%s1 + $0x288] sm:$0xff]
  %v130 = vld [vmem:[%s1 + $0x290] sm:$0xff]
  %v131 = vld [vmem:[%s1 + $0x298] sm:$0xff]
  %v132 = vld [vmem:[%s1 + $0x2a0] sm:$0xff]
  %v133 = vld [vmem:[%s1 + $0x2a8] sm:$0xff]
  %v134 = vld [vmem:[%s1 + $0x2b0] sm:$0xff]
  %v135 = vld [vmem:[%s1 + $0x2b8] sm:$0xff]
  %v136 = vld [vmem:[%s1 + $0x2c0] sm:$0xff]
  %v137 = vld [vmem:[%s1 + $0x2c8] sm:$0xff]
  %v138 = vld [vmem:[%s1 + $0x2d0] sm:$0xff]
  %v139 = vld [vmem:[%s1 + $0x2d8] sm:$0xff]
  %v140 = vld [vmem:[%s1 + $0x2e0] sm:$0xff]
  %v141 = vld [vmem:[%s1 + $0x2e8] sm:$0xff]
  %v142 = vld [vmem:[%s1 + $0x2f0] sm:$0xff]
  %v143 = vld [vmem:[%s1 + $0x2f8] sm:$0xff]
  %v144 = vld [vmem:[%s1 + $0x300] sm:$0xff]
  %v145 = vld [vmem:[%s1 + $0x308] sm:$0xff]
  %v146 = vld [vmem:[%s2] sm:$0x3]
  %v148 = vlaneseq
  %v149 = vshrl.u32 %v148, 7
  %v150 = vsub.s32 0, %v149
  %v151 = vrot.slane %v146, %v150
  %v152 = vlaneseq
  %v153 = vshrl.u32 %v152, 7
  %v154 = vsub.s32 1, %v153
  %v155 = vrot.slane %v146, %v154
  %v256 = vunpack.c.l.b16 %v48
  %v257 = vunpack.c.h.b16 %v48
  %v258 = vunpack.c.l.b16 %v49
  %v259 = vunpack.c.h.b16 %v49
  %v260 = vunpack.c.l.b16 %v50
  %v261 = vunpack.c.h.b16 %v50
  %v262 = vunpack.c.l.b16 %v51
  %v263 = vunpack.c.h.b16 %v51
  %v264 = vunpack.c.l.b16 %v52
  %v265 = vunpack.c.h.b16 %v52
  %v266 = vunpack.c.l.b16 %v53
  %v267 = vunpack.c.h.b16 %v53
  %v268 = vunpack.c.l.b16 %v54
  %v269 = vunpack.c.h.b16 %v54
  %v270 = vunpack.c.l.b16 %v55
  %v271 = vunpack.c.h.b16 %v55
  %v272 = vunpack.c.l.b16 %v56
  %v273 = vunpack.c.h.b16 %v56
  %v274 = vunpack.c.l.b16 %v57
  %v275 = vunpack.c.h.b16 %v57
  %v276 = vunpack.c.l.b16 %v58
  %v277 = vunpack.c.h.b16 %v58
  %v278 = vunpack.c.l.b16 %v59
  %v279 = vunpack.c.h.b16 %v59
  %v280 = vunpack.c.l.b16 %v60
  %v281 = vunpack.c.h.b16 %v60
  %v282 = vunpack.c.l.b16 %v61
  %v283 = vunpack.c.h.b16 %v61
  %v284 = vunpack.c.l.b16 %v62
  %v285 = vunpack.c.h.b16 %v62
  %v286 = vunpack.c.l.b16 %v63
  %v287 = vunpack.c.h.b16 %v63
  %v288 = vunpack.c.l.b16 %v64
  %v289 = vunpack.c.h.b16 %v64
  %v290 = vunpack.c.l.b16 %v65
  %v291 = vunpack.c.h.b16 %v65
  %v292 = vunpack.c.l.b16 %v66
  %v293 = vunpack.c.h.b16 %v66
  %v294 = vunpack.c.l.b16 %v67
  %v295 = vunpack.c.h.b16 %v67
  %v296 = vunpack.c.l.b16 %v68
  %v297 = vunpack.c.h.b16 %v68
  %v298 = vunpack.c.l.b16 %v69
  %v299 = vunpack.c.h.b16 %v69
  %v300 = vunpack.c.l.b16 %v70
  %v301 = vunpack.c.h.b16 %v70
  %v302 = vunpack.c.l.b16 %v71
  %v303 = vunpack.c.h.b16 %v71
  %v304 = vunpack.c.l.b16 %v72
  %v305 = vunpack.c.h.b16 %v72
  %v306 = vunpack.c.l.b16 %v73
  %v307 = vunpack.c.h.b16 %v73
  %v308 = vunpack.c.l.b16 %v74
  %v309 = vunpack.c.h.b16 %v74
  %v310 = vunpack.c.l.b16 %v75
  %v311 = vunpack.c.h.b16 %v75
  %v312 = vunpack.c.l.b16 %v76
  %v313 = vunpack.c.h.b16 %v76
  %v314 = vunpack.c.l.b16 %v77
  %v315 = vunpack.c.h.b16 %v77
  %v316 = vunpack.c.l.b16 %v78
  %v317 = vunpack.c.h.b16 %v78
  %v318 = vunpack.c.l.b16 %v79
  %v319 = vunpack.c.h.b16 %v79
  %v320 = vunpack.c.l.b16 %v80
  %v321 = vunpack.c.h.b16 %v80
  %v322 = vunpack.c.l.b16 %v81
  %v323 = vunpack.c.h.b16 %v81
  %v324 = vunpack.c.l.b16 %v82
  %v325 = vunpack.c.h.b16 %v82
  %v326 = vunpack.c.l.b16 %v83
  %v327 = vunpack.c.h.b16 %v83
  %v328 = vunpack.c.l.b16 %v84
  %v329 = vunpack.c.h.b16 %v84
  %v330 = vunpack.c.l.b16 %v85
  %v331 = vunpack.c.h.b16 %v85
  %v332 = vunpack.c.l.b16 %v86
  %v333 = vunpack.c.h.b16 %v86
  %v334 = vunpack.c.l.b16 %v87
  %v335 = vunpack.c.h.b16 %v87
  %v336 = vunpack.c.l.b16 %v88
  %v337 = vunpack.c.h.b16 %v88
  %v338 = vunpack.c.l.b16 %v89
  %v339 = vunpack.c.h.b16 %v89
  %v340 = vunpack.c.l.b16 %v90
  %v341 = vunpack.c.h.b16 %v90
  %v342 = vunpack.c.l.b16 %v91
  %v343 = vunpack.c.h.b16 %v91
  %v344 = vunpack.c.l.b16 %v92
  %v345 = vunpack.c.h.b16 %v92
  %v346 = vunpack.c.l.b16 %v93
  %v347 = vunpack.c.h.b16 %v93
  %v348 = vunpack.c.l.b16 %v94
  %v349 = vunpack.c.h.b16 %v94
  %v350 = vunpack.c.l.b16 %v95
  %v351 = vunpack.c.h.b16 %v95
  %v352 = vunpack.c.l.b16 %v96
  %v353 = vunpack.c.h.b16 %v96
  %v354 = vunpack.c.l.b16 %v97
  %v355 = vunpack.c.h.b16 %v97
  %v356 = vunpack.c.l.b16 %v98
  %v357 = vunpack.c.h.b16 %v98
  %v358 = vunpack.c.l.b16 %v99
  %v359 = vunpack.c.h.b16 %v99
  %v360 = vunpack.c.l.b16 %v100
  %v361 = vunpack.c.h.b16 %v100
  %v362 = vunpack.c.l.b16 %v101
  %v363 = vunpack.c.h.b16 %v101
  %v364 = vunpack.c.l.b16 %v102
  %v365 = vunpack.c.h.b16 %v102
  %v366 = vunpack.c.l.b16 %v103
  %v367 = vunpack.c.h.b16 %v103
  %v368 = vunpack.c.l.b16 %v104
  %v369 = vunpack.c.h.b16 %v104
  %v370 = vunpack.c.l.b16 %v105
  %v371 = vunpack.c.h.b16 %v105
  %v372 = vunpack.c.l.b16 %v106
  %v373 = vunpack.c.h.b16 %v106
  %v374 = vunpack.c.l.b16 %v107
  %v375 = vunpack.c.h.b16 %v107
  %v376 = vunpack.c.l.b16 %v108
  %v377 = vunpack.c.h.b16 %v108
  %v378 = vunpack.c.l.b16 %v109
  %v379 = vunpack.c.h.b16 %v109
  %v380 = vunpack.c.l.b16 %v110
  %v381 = vunpack.c.h.b16 %v110
  %v382 = vunpack.c.l.b16 %v111
  %v383 = vunpack.c.h.b16 %v111
  %v384 = vunpack.c.l.b16 %v112
  %v385 = vunpack.c.h.b16 %v112
  %v386 = vunpack.c.l.b16 %v113
  %v387 = vunpack.c.h.b16 %v113
  %v388 = vunpack.c.l.b16 %v114
  %v389 = vunpack.c.h.b16 %v114
  %v390 = vunpack.c.l.b16 %v115
  %v391 = vunpack.c.h.b16 %v115
  %v392 = vunpack.c.l.b16 %v116
  %v393 = vunpack.c.h.b16 %v116
  %v394 = vunpack.c.l.b16 %v117
  %v395 = vunpack.c.h.b16 %v117
  %v396 = vunpack.c.l.b16 %v118
  %v397 = vunpack.c.h.b16 %v118
  %v398 = vunpack.c.l.b16 %v119
  %v399 = vunpack.c.h.b16 %v119
  %v400 = vunpack.c.l.b16 %v120
  %v401 = vunpack.c.h.b16 %v120
  %v402 = vunpack.c.l.b16 %v121
  %v403 = vunpack.c.h.b16 %v121
  %v404 = vunpack.c.l.b16 %v122
  %v405 = vunpack.c.h.b16 %v122
  %v406 = vunpack.c.l.b16 %v123
  %v407 = vunpack.c.h.b16 %v123
  %v408 = vunpack.c.l.b16 %v124
  %v409 = vunpack.c.h.b16 %v124
  %v410 = vunpack.c.l.b16 %v125
  %v411 = vunpack.c.h.b16 %v125
  %v412 = vunpack.c.l.b16 %v126
  %v413 = vunpack.c.h.b16 %v126
  %v414 = vunpack.c.l.b16 %v127
  %v415 = vunpack.c.h.b16 %v127
  %v416 = vunpack.c.l.b16 %v128
  %v417 = vunpack.c.h.b16 %v128
  %v418 = vunpack.c.l.b16 %v129
  %v419 = vunpack.c.h.b16 %v129
  %v420 = vunpack.c.l.b16 %v130
  %v421 = vunpack.c.h.b16 %v130
  %v422 = vunpack.c.l.b16 %v131
  %v423 = vunpack.c.h.b16 %v131
  %v424 = vunpack.c.l.b16 %v132
  %v425 = vunpack.c.h.b16 %v132
  %v426 = vunpack.c.l.b16 %v133
  %v427 = vunpack.c.h.b16 %v133
  %v428 = vunpack.c.l.b16 %v134
  %v429 = vunpack.c.h.b16 %v134
  %v430 = vunpack.c.l.b16 %v135
  %v431 = vunpack.c.h.b16 %v135
  %v432 = vunpack.c.l.b16 %v136
  %v433 = vunpack.c.h.b16 %v136
  %v434 = vunpack.c.l.b16 %v137
  %v435 = vunpack.c.h.b16 %v137
  %v436 = vunpack.c.l.b16 %v138
  %v437 = vunpack.c.h.b16 %v138
  %v438 = vunpack.c.l.b16 %v139
  %v439 = vunpack.c.h.b16 %v139
  %v440 = vunpack.c.l.b16 %v140
  %v441 = vunpack.c.h.b16 %v140
  %v442 = vunpack.c.l.b16 %v141
  %v443 = vunpack.c.h.b16 %v141
  %v444 = vunpack.c.l.b16 %v142
  %v445 = vunpack.c.h.b16 %v142
  %v446 = vunpack.c.l.b16 %v143
  %v447 = vunpack.c.h.b16 %v143
  %v448 = vunpack.c.l.b16 %v144
  %v449 = vunpack.c.h.b16 %v144
  %v450 = vunpack.c.l.b16 %v145
  %v451 = vunpack.c.h.b16 %v145
  %v452 = vpack.c.b16 %v258, %v256
  %v453 = vpack.c.b16 %v259, %v257
  %v454 = vpack.c.b16 %v262, %v260
  %v455 = vpack.c.b16 %v263, %v261
  %v456 = vpack.c.b16 %v266, %v264
  %v457 = vpack.c.b16 %v267, %v265
  %v458 = vpack.c.b16 %v270, %v268
  %v459 = vpack.c.b16 %v271, %v269
  %v460 = vpack.c.b16 %v274, %v272
  %v461 = vpack.c.b16 %v275, %v273
  %v462 = vpack.c.b16 %v278, %v276
  %v463 = vpack.c.b16 %v279, %v277
  %v464 = vpack.c.b16 %v282, %v280
  %v465 = vpack.c.b16 %v283, %v281
  %v466 = vpack.c.b16 %v286, %v284
  %v467 = vpack.c.b16 %v287, %v285
  %v468 = vpack.c.b16 %v290, %v288
  %v469 = vpack.c.b16 %v291, %v289
  %v470 = vpack.c.b16 %v294, %v292
  %v471 = vpack.c.b16 %v295, %v293
  %v472 = vpack.c.b16 %v298, %v296
  %v473 = vpack.c.b16 %v299, %v297
  %v474 = vpack.c.b16 %v302, %v300
  %v475 = vpack.c.b16 %v303, %v301
  %v476 = vpack.c.b16 %v306, %v304
  %v477 = vpack.c.b16 %v307, %v305
  %v478 = vpack.c.b16 %v310, %v308
  %v479 = vpack.c.b16 %v311, %v309
  %v480 = vpack.c.b16 %v314, %v312
  %v481 = vpack.c.b16 %v315, %v313
  %v482 = vpack.c.b16 %v318, %v316
  %v483 = vpack.c.b16 %v319, %v317
  %v484 = vpack.c.b16 %v322, %v320
  %v485 = vpack.c.b16 %v323, %v321
  %v486 = vpack.c.b16 %v326, %v324
  %v487 = vpack.c.b16 %v327, %v325
  %v488 = vpack.c.b16 %v330, %v328
  %v489 = vpack.c.b16 %v331, %v329
  %v490 = vpack.c.b16 %v334, %v332
  %v491 = vpack.c.b16 %v335, %v333
  %v492 = vpack.c.b16 %v338, %v336
  %v493 = vpack.c.b16 %v339, %v337
  %v494 = vpack.c.b16 %v342, %v340
  %v495 = vpack.c.b16 %v343, %v341
  %v496 = vpack.c.b16 %v346, %v344
  %v497 = vpack.c.b16 %v347, %v345
  %v498 = vpack.c.b16 %v350, %v348
  %v499 = vpack.c.b16 %v351, %v349
  %v500 = vpack.c.b16 %v354, %v352
  %v501 = vpack.c.b16 %v355, %v353
  %v502 = vpack.c.b16 %v358, %v356
  %v503 = vpack.c.b16 %v359, %v357
  %v504 = vpack.c.b16 %v362, %v360
  %v505 = vpack.c.b16 %v363, %v361
  %v506 = vpack.c.b16 %v366, %v364
  %v507 = vpack.c.b16 %v367, %v365
  %v508 = vpack.c.b16 %v370, %v368
  %v509 = vpack.c.b16 %v371, %v369
  %v510 = vpack.c.b16 %v374, %v372
  %v511 = vpack.c.b16 %v375, %v373
  %v512 = vpack.c.b16 %v378, %v376
  %v513 = vpack.c.b16 %v379, %v377
  %v514 = vpack.c.b16 %v382, %v380
  %v515 = vpack.c.b16 %v383, %v381
  %v516 = vpack.c.b16 %v386, %v384
  %v517 = vpack.c.b16 %v387, %v385
  %v518 = vpack.c.b16 %v390, %v388
  %v519 = vpack.c.b16 %v391, %v389
  %v520 = vpack.c.b16 %v394, %v392
  %v521 = vpack.c.b16 %v395, %v393
  %v522 = vpack.c.b16 %v398, %v396
  %v523 = vpack.c.b16 %v399, %v397
  %v524 = vpack.c.b16 %v402, %v400
  %v525 = vpack.c.b16 %v403, %v401
  %v526 = vpack.c.b16 %v406, %v404
  %v527 = vpack.c.b16 %v407, %v405
  %v528 = vpack.c.b16 %v410, %v408
  %v529 = vpack.c.b16 %v411, %v409
  %v530 = vpack.c.b16 %v414, %v412
  %v531 = vpack.c.b16 %v415, %v413
  %v532 = vpack.c.b16 %v418, %v416
  %v533 = vpack.c.b16 %v419, %v417
  %v534 = vpack.c.b16 %v422, %v420
  %v535 = vpack.c.b16 %v423, %v421
  %v536 = vpack.c.b16 %v426, %v424
  %v537 = vpack.c.b16 %v427, %v425
  %v538 = vpack.c.b16 %v430, %v428
  %v539 = vpack.c.b16 %v431, %v429
  %v540 = vpack.c.b16 %v434, %v432
  %v541 = vpack.c.b16 %v435, %v433
  %v542 = vpack.c.b16 %v438, %v436
  %v543 = vpack.c.b16 %v439, %v437
  %v544 = vpack.c.b16 %v442, %v440
  %v545 = vpack.c.b16 %v443, %v441
  %v546 = vpack.c.b16 %v446, %v444
  %v547 = vpack.c.b16 %v447, %v445
  %v548 = vpack.c.b16 %v450, %v448
  %v549 = vpack.c.b16 %v451, %v449
  %vm648 = vcmask 130048
  %v650 = vsel %vm648, %v47, 0
  %652 = vmatprep.subr.bf16.mxu0 %v467
  %653 = vmatpush1.bf16.msra.mxu0 %v466
  %654 = vmatprep.subr.bf16.mxu0 %v465
  %655 = vmatpush1.bf16.msra.mxu0 %v464
  %656 = vmatprep.subr.bf16.mxu0 %v463
  %657 = vmatpush1.bf16.msra.mxu0 %v462
  %658 = vmatprep.subr.bf16.mxu0 %v461
  %659 = vmatpush1.bf16.msra.mxu0 %v460
  %660 = vmatprep.subr.bf16.mxu0 %v459
  %661 = vmatpush1.bf16.msra.mxu0 %v458
  %662 = vmatprep.subr.bf16.mxu0 %v457
  %663 = vmatpush1.bf16.msra.mxu0 %v456
  %664 = vmatprep.subr.bf16.mxu0 %v455
  %665 = vmatpush1.bf16.msra.mxu0 %v454
  %666 = vmatprep.subr.bf16.mxu0 %v453
  %667 = vmatpush1.bf16.msra.mxu0 %v452
  %668 = vmatprep.subr.bf16.mxu0 %v483
  %669 = vmatpush2.bf16.msra.mxu0 %v482
  %670 = vmatprep.subr.bf16.mxu0 %v481
  %671 = vmatpush2.bf16.msra.mxu0 %v480
  %672 = vmatprep.subr.bf16.mxu0 %v479
  %673 = vmatpush2.bf16.msra.mxu0 %v478
  %674 = vmatprep.subr.bf16.mxu0 %v477
  %675 = vmatpush2.bf16.msra.mxu0 %v476
  %676 = vmatprep.subr.bf16.mxu0 %v475
  %677 = vmatpush2.bf16.msra.mxu0 %v474
  %678 = vmatprep.subr.bf16.mxu0 %v473
  %679 = vmatpush2.bf16.msra.mxu0 %v472
  %680 = vmatprep.subr.bf16.mxu0 %v471
  %681 = vmatpush2.bf16.msra.mxu0 %v470
  %682 = vmatprep.subr.bf16.mxu0 %v469
  %683 = vmatpush2.bf16.msra.mxu0 %v468
  %684 = vmatprep.mubr.bf16.mxu0 %v42
  %685 = vmatmul.mubr.bf16.gmra.mxu0 %v41
  %v686 = vpop.f32.mrf.mxu0
  %v687 = vadd.f32 %v151, %v686
  %v688 = vpop.f32.mrf.mxu0
  %v689 = vadd.f32 %v155, %v688
  %v690 = vpop.f32.mrf.mxu0
  %v691 = vadd.f32 %v151, %v690
  %v692 = vpop.f32.mrf.mxu0
  %v693 = vadd.f32 %v155, %v692
  %694 = vdwg.mxu0
  %695 = vmatprep.subr.bf16.mxu0 %v499
  %696 = vmatpush1.bf16.msra.mxu0 %v498
  %697 = vmatprep.subr.bf16.mxu0 %v497
  %698 = vmatpush1.bf16.msra.mxu0 %v496
  %699 = vmatprep.subr.bf16.mxu0 %v495
  %700 = vmatpush1.bf16.msra.mxu0 %v494
  %701 = vmatprep.subr.bf16.mxu0 %v493
  %702 = vmatpush1.bf16.msra.mxu0 %v492
  %703 = vmatprep.subr.bf16.mxu0 %v491
  %704 = vmatpush1.bf16.msra.mxu0 %v490
  %705 = vmatprep.subr.bf16.mxu0 %v489
  %706 = vmatpush1.bf16.msra.mxu0 %v488
  %707 = vmatprep.subr.bf16.mxu0 %v487
  %708 = vmatpush1.bf16.msra.mxu0 %v486
  %709 = vmatprep.subr.bf16.mxu0 %v485
  %710 = vmatpush1.bf16.msra.mxu0 %v484
  %711 = vmatprep.subr.bf16.mxu0 %v515
  %712 = vmatpush2.bf16.msra.mxu0 %v514
  %713 = vmatprep.subr.bf16.mxu0 %v513
  %714 = vmatpush2.bf16.msra.mxu0 %v512
  %715 = vmatprep.subr.bf16.mxu0 %v511
  %716 = vmatpush2.bf16.msra.mxu0 %v510
  %717 = vmatprep.subr.bf16.mxu0 %v509
  %718 = vmatpush2.bf16.msra.mxu0 %v508
  %719 = vmatprep.subr.bf16.mxu0 %v507
  %720 = vmatpush2.bf16.msra.mxu0 %v506
  %721 = vmatprep.subr.bf16.mxu0 %v505
  %722 = vmatpush2.bf16.msra.mxu0 %v504
  %723 = vmatprep.subr.bf16.mxu0 %v503
  %724 = vmatpush2.bf16.msra.mxu0 %v502
  %725 = vmatprep.subr.bf16.mxu0 %v501
  %726 = vmatpush2.bf16.msra.mxu0 %v500
  %727 = vmatprep.mubr.bf16.mxu0 %v44
  %728 = vmatmul.mubr.bf16.gmra.mxu0 %v43
  %v729 = vpop.f32.mrf.mxu0
  %v730 = vadd.f32 %v687, %v729
  %v731 = vpop.f32.mrf.mxu0
  %v732 = vadd.f32 %v689, %v731
  %v733 = vpop.f32.mrf.mxu0
  %v734 = vadd.f32 %v691, %v733
  %v735 = vpop.f32.mrf.mxu0
  %v736 = vadd.f32 %v693, %v735
  %737 = vdwg.mxu0
  %738 = vmatprep.subr.bf16.mxu0 %v531
  %739 = vmatpush1.bf16.msra.mxu0 %v530
  %740 = vmatprep.subr.bf16.mxu0 %v529
  %741 = vmatpush1.bf16.msra.mxu0 %v528
  %742 = vmatprep.subr.bf16.mxu0 %v527
  %743 = vmatpush1.bf16.msra.mxu0 %v526
  %744 = vmatprep.subr.bf16.mxu0 %v525
  %745 = vmatpush1.bf16.msra.mxu0 %v524
  %746 = vmatprep.subr.bf16.mxu0 %v523
  %747 = vmatpush1.bf16.msra.mxu0 %v522
  %748 = vmatprep.subr.bf16.mxu0 %v521
  %749 = vmatpush1.bf16.msra.mxu0 %v520
  %750 = vmatprep.subr.bf16.mxu0 %v519
  %751 = vmatpush1.bf16.msra.mxu0 %v518
  %752 = vmatprep.subr.bf16.mxu0 %v517
  %753 = vmatpush1.bf16.msra.mxu0 %v516
  %754 = vmatprep.subr.bf16.mxu0 %v547
  %755 = vmatpush2.bf16.msra.mxu0 %v546
  %756 = vmatprep.subr.bf16.mxu0 %v545
  %757 = vmatpush2.bf16.msra.mxu0 %v544
  %758 = vmatprep.subr.bf16.mxu0 %v543
  %759 = vmatpush2.bf16.msra.mxu0 %v542
  %760 = vmatprep.subr.bf16.mxu0 %v541
  %761 = vmatpush2.bf16.msra.mxu0 %v540
  %762 = vmatprep.subr.bf16.mxu0 %v539
  %763 = vmatpush2.bf16.msra.mxu0 %v538
  %764 = vmatprep.subr.bf16.mxu0 %v537
  %765 = vmatpush2.bf16.msra.mxu0 %v536
  %766 = vmatprep.subr.bf16.mxu0 %v535
  %767 = vmatpush2.bf16.msra.mxu0 %v534
  %768 = vmatprep.subr.bf16.mxu0 %v533
  %769 = vmatpush2.bf16.msra.mxu0 %v532
  %770 = vmatprep.mubr.bf16.mxu0 %v46
  %771 = vmatmul.mubr.bf16.gmra.mxu0 %v45
  %v772 = vpop.f32.mrf.mxu0
  %v773 = vadd.f32 %v730, %v772
  %v774 = vpop.f32.mrf.mxu0
  %v775 = vadd.f32 %v732, %v774
  %v776 = vpop.f32.mrf.mxu0
  %v777 = vadd.f32 %v734, %v776
  %v778 = vpop.f32.mrf.mxu0
  %v779 = vadd.f32 %v736, %v778
  %780 = vdwg.mxu0
  %781 = vmatprep.subr.bf16.mxu0 0
  %782 = vmatpush1.bf16.msra.mxu0 0
  %783 = vmatprep.subr.bf16.mxu0 0
  %784 = vmatpush1.bf16.msra.mxu0 0
  %785 = vmatprep.subr.bf16.mxu0 0
  %786 = vmatpush1.bf16.msra.mxu0 0
  %787 = vmatprep.subr.bf16.mxu0 0
  %788 = vmatpush1.bf16.msra.mxu0 0
  %789 = vmatprep.subr.bf16.mxu0 0
  %790 = vmatpush1.bf16.msra.mxu0 0
  %791 = vmatprep.subr.bf16.mxu0 0
  %792 = vmatpush1.bf16.msra.mxu0 0
  %793 = vmatprep.subr.bf16.mxu0 0
  %794 = vmatpush1.bf16.msra.mxu0 0
  %795 = vmatprep.subr.bf16.mxu0 %v549
  %796 = vmatpush1.bf16.msra.mxu0 %v548
  %797 = vmatprep.subr.bf16.mxu0 0
  %798 = vmatpush2.bf16.msra.mxu0 0
  %799 = vmatprep.subr.bf16.mxu0 0
  %800 = vmatpush2.bf16.msra.mxu0 0
  %801 = vmatprep.subr.bf16.mxu0 0
  %802 = vmatpush2.bf16.msra.mxu0 0
  %803 = vmatprep.subr.bf16.mxu0 0
  %804 = vmatpush2.bf16.msra.mxu0 0
  %805 = vmatprep.subr.bf16.mxu0 0
  %806 = vmatpush2.bf16.msra.mxu0 0
  %807 = vmatprep.subr.bf16.mxu0 0
  %808 = vmatpush2.bf16.msra.mxu0 0
  %809 = vmatprep.subr.bf16.mxu0 0
  %810 = vmatpush2.bf16.msra.mxu0 0
  %811 = vmatprep.subr.bf16.mxu0 0
  %812 = vmatpush2.bf16.msra.mxu0 0
  %813 = vmatprep.mubr.bf16.mxu0 0
  %814 = vmatmul.mubr.bf16.gmra.mxu0 %v650
  %v815 = vpop.f32.mrf.mxu0
  %v816 = vadd.f32 %v773, %v815
  %v817 = vpop.f32.mrf.mxu0
  %v818 = vadd.f32 %v775, %v817
  %v819 = vpop.f32.mrf.mxu0
  %v820 = vadd.f32 %v777, %v819
  %v821 = vpop.f32.mrf.mxu0
  %v822 = vadd.f32 %v779, %v821
  %823 = vdwg.mxu0
  %v824 = vmax.f32 %v816, 0.0
  %v825 = vmax.f32 %v818, 0.0
  %v826 = vmax.f32 %v820, 0.0
  %v827 = vmax.f32 %v822, 0.0
  %v828 = vpack.c.bf16 %v826, %v824
  %v829 = vpack.c.bf16 %v827, %v825
  %v830 = vld [vmem:[%s3] sm:$0xff]
  %v831 = vld [vmem:[%s3 + $0x8] sm:$0xff]
  %v832 = vld [vmem:[%s3 + $0x10] sm:$0xff]
  %v833 = vld [vmem:[%s3 + $0x18] sm:$0xff]
  %v834 = vld [vmem:[%s3 + $0x20] sm:$0xff]
  %v835 = vld [vmem:[%s3 + $0x28] sm:$0xff]
  %v836 = vld [vmem:[%s3 + $0x30] sm:$0xff]
  %v837 = vld [vmem:[%s3 + $0x38] sm:$0xff]
  %v838 = vld [vmem:[%s3 + $0x40] sm:$0xff]
  %v839 = vld [vmem:[%s3 + $0x48] sm:$0xff]
  %v840 = vld [vmem:[%s3 + $0x50] sm:$0xff]
  %v841 = vld [vmem:[%s3 + $0x58] sm:$0xff]
  %v842 = vld [vmem:[%s3 + $0x60] sm:$0xff]
  %v843 = vld [vmem:[%s3 + $0x68] sm:$0xff]
  %v844 = vld [vmem:[%s3 + $0x70] sm:$0xff]
  %v845 = vld [vmem:[%s3 + $0x78] sm:$0xff]
  %v846 = vld [vmem:[%s3 + $0x80] sm:$0xff]
  %v847 = vld [vmem:[%s3 + $0x88] sm:$0xff]
  %v848 = vld [vmem:[%s3 + $0x90] sm:$0xff]
  %v849 = vld [vmem:[%s3 + $0x98] sm:$0xff]
  %v850 = vld [vmem:[%s3 + $0xa0] sm:$0xff]
  %v851 = vld [vmem:[%s3 + $0xa8] sm:$0xff]
  %v852 = vld [vmem:[%s3 + $0xb0] sm:$0xff]
  %v853 = vld [vmem:[%s3 + $0xb8] sm:$0xff]
  %v854 = vld [vmem:[%s3 + $0xc0] sm:$0xff]
  %v855 = vld [vmem:[%s3 + $0xc8] sm:$0xff]
  %v856 = vld [vmem:[%s3 + $0xd0] sm:$0xff]
  %v857 = vld [vmem:[%s3 + $0xd8] sm:$0xff]
  %v858 = vld [vmem:[%s3 + $0xe0] sm:$0xff]
  %v859 = vld [vmem:[%s3 + $0xe8] sm:$0xff]
  %v860 = vld [vmem:[%s3 + $0xf0] sm:$0xff]
  %v861 = vld [vmem:[%s3 + $0xf8] sm:$0xff]
  %v862 = vld [vmem:[%s4] sm:$0x3]
  %v864 = vlaneseq
  %v865 = vshrl.u32 %v864, 7
  %v866 = vsub.s32 0, %v865
  %v867 = vrot.slane %v862, %v866
  %v868 = vlaneseq
  %v869 = vshrl.u32 %v868, 7
  %v870 = vsub.s32 1, %v869
  %v871 = vrot.slane %v862, %v870
  %v906 = vunpack.c.l.b16 %v830
  %v907 = vunpack.c.h.b16 %v830
  %v908 = vunpack.c.l.b16 %v831
  %v909 = vunpack.c.h.b16 %v831
  %v910 = vunpack.c.l.b16 %v832
  %v911 = vunpack.c.h.b16 %v832
  %v912 = vunpack.c.l.b16 %v833
  %v913 = vunpack.c.h.b16 %v833
  %v914 = vunpack.c.l.b16 %v834
  %v915 = vunpack.c.h.b16 %v834
  %v916 = vunpack.c.l.b16 %v835
  %v917 = vunpack.c.h.b16 %v835
  %v918 = vunpack.c.l.b16 %v836
  %v919 = vunpack.c.h.b16 %v836
  %v920 = vunpack.c.l.b16 %v837
  %v921 = vunpack.c.h.b16 %v837
  %v922 = vunpack.c.l.b16 %v838
  %v923 = vunpack.c.h.b16 %v838
  %v924 = vunpack.c.l.b16 %v839
  %v925 = vunpack.c.h.b16 %v839
  %v926 = vunpack.c.l.b16 %v840
  %v927 = vunpack.c.h.b16 %v840
  %v928 = vunpack.c.l.b16 %v841
  %v929 = vunpack.c.h.b16 %v841
  %v930 = vunpack.c.l.b16 %v842
  %v931 = vunpack.c.h.b16 %v842
  %v932 = vunpack.c.l.b16 %v843
  %v933 = vunpack.c.h.b16 %v843
  %v934 = vunpack.c.l.b16 %v844
  %v935 = vunpack.c.h.b16 %v844
  %v936 = vunpack.c.l.b16 %v845
  %v937 = vunpack.c.h.b16 %v845
  %v938 = vunpack.c.l.b16 %v846
  %v939 = vunpack.c.h.b16 %v846
  %v940 = vunpack.c.l.b16 %v847
  %v941 = vunpack.c.h.b16 %v847
  %v942 = vunpack.c.l.b16 %v848
  %v943 = vunpack.c.h.b16 %v848
  %v944 = vunpack.c.l.b16 %v849
  %v945 = vunpack.c.h.b16 %v849
  %v946 = vunpack.c.l.b16 %v850
  %v947 = vunpack.c.h.b16 %v850
  %v948 = vunpack.c.l.b16 %v851
  %v949 = vunpack.c.h.b16 %v851
  %v950 = vunpack.c.l.b16 %v852
  %v951 = vunpack.c.h.b16 %v852
  %v952 = vunpack.c.l.b16 %v853
  %v953 = vunpack.c.h.b16 %v853
  %v954 = vunpack.c.l.b16 %v854
  %v955 = vunpack.c.h.b16 %v854
  %v956 = vunpack.c.l.b16 %v855
  %v957 = vunpack.c.h.b16 %v855
  %v958 = vunpack.c.l.b16 %v856
  %v959 = vunpack.c.h.b16 %v856
  %v960 = vunpack.c.l.b16 %v857
  %v961 = vunpack.c.h.b16 %v857
  %v962 = vunpack.c.l.b16 %v858
  %v963 = vunpack.c.h.b16 %v858
  %v964 = vunpack.c.l.b16 %v859
  %v965 = vunpack.c.h.b16 %v859
  %v966 = vunpack.c.l.b16 %v860
  %v967 = vunpack.c.h.b16 %v860
  %v968 = vunpack.c.l.b16 %v861
  %v969 = vunpack.c.h.b16 %v861
  %v970 = vpack.c.b16 %v908, %v906
  %v971 = vpack.c.b16 %v909, %v907
  %v972 = vpack.c.b16 %v912, %v910
  %v973 = vpack.c.b16 %v913, %v911
  %v974 = vpack.c.b16 %v916, %v914
  %v975 = vpack.c.b16 %v917, %v915
  %v976 = vpack.c.b16 %v920, %v918
  %v977 = vpack.c.b16 %v921, %v919
  %v978 = vpack.c.b16 %v924, %v922
  %v979 = vpack.c.b16 %v925, %v923
  %v980 = vpack.c.b16 %v928, %v926
  %v981 = vpack.c.b16 %v929, %v927
  %v982 = vpack.c.b16 %v932, %v930
  %v983 = vpack.c.b16 %v933, %v931
  %v984 = vpack.c.b16 %v936, %v934
  %v985 = vpack.c.b16 %v937, %v935
  %v986 = vpack.c.b16 %v940, %v938
  %v987 = vpack.c.b16 %v941, %v939
  %v988 = vpack.c.b16 %v944, %v942
  %v989 = vpack.c.b16 %v945, %v943
  %v990 = vpack.c.b16 %v948, %v946
  %v991 = vpack.c.b16 %v949, %v947
  %v992 = vpack.c.b16 %v952, %v950
  %v993 = vpack.c.b16 %v953, %v951
  %v994 = vpack.c.b16 %v956, %v954
  %v995 = vpack.c.b16 %v957, %v955
  %v996 = vpack.c.b16 %v960, %v958
  %v997 = vpack.c.b16 %v961, %v959
  %v998 = vpack.c.b16 %v964, %v962
  %v999 = vpack.c.b16 %v965, %v963
  %v1000 = vpack.c.b16 %v968, %v966
  %v1001 = vpack.c.b16 %v969, %v967
  %1034 = vmatprep.subr.bf16.mxu0 %v985
  %1035 = vmatpush1.bf16.msra.mxu0 %v984
  %1036 = vmatprep.subr.bf16.mxu0 %v983
  %1037 = vmatpush1.bf16.msra.mxu0 %v982
  %1038 = vmatprep.subr.bf16.mxu0 %v981
  %1039 = vmatpush1.bf16.msra.mxu0 %v980
  %1040 = vmatprep.subr.bf16.mxu0 %v979
  %1041 = vmatpush1.bf16.msra.mxu0 %v978
  %1042 = vmatprep.subr.bf16.mxu0 %v977
  %1043 = vmatpush1.bf16.msra.mxu0 %v976
  %1044 = vmatprep.subr.bf16.mxu0 %v975
  %1045 = vmatpush1.bf16.msra.mxu0 %v974
  %1046 = vmatprep.subr.bf16.mxu0 %v973
  %1047 = vmatpush1.bf16.msra.mxu0 %v972
  %1048 = vmatprep.subr.bf16.mxu0 %v971
  %1049 = vmatpush1.bf16.msra.mxu0 %v970
  %1050 = vmatprep.subr.bf16.mxu0 %v1001
  %1051 = vmatpush2.bf16.msra.mxu0 %v1000
  %1052 = vmatprep.subr.bf16.mxu0 %v999
  %1053 = vmatpush2.bf16.msra.mxu0 %v998
  %1054 = vmatprep.subr.bf16.mxu0 %v997
  %1055 = vmatpush2.bf16.msra.mxu0 %v996
  %1056 = vmatprep.subr.bf16.mxu0 %v995
  %1057 = vmatpush2.bf16.msra.mxu0 %v994
  %1058 = vmatprep.subr.bf16.mxu0 %v993
  %1059 = vmatpush2.bf16.msra.mxu0 %v992
  %1060 = vmatprep.subr.bf16.mxu0 %v991
  %1061 = vmatpush2.bf16.msra.mxu0 %v990
  %1062 = vmatprep.subr.bf16.mxu0 %v989
  %1063 = vmatpush2.bf16.msra.mxu0 %v988
  %1064 = vmatprep.subr.bf16.mxu0 %v987
  %1065 = vmatpush2.bf16.msra.mxu0 %v986
  %1066 = vmatprep.mubr.bf16.mxu0 %v829
  %1067 = vmatmul.mubr.bf16.gmra.mxu0 %v828
  %v1068 = vpop.f32.mrf.mxu0
  %v1069 = vadd.f32 %v867, %v1068
  %v1070 = vpop.f32.mrf.mxu0
  %v1071 = vadd.f32 %v871, %v1070
  %v1072 = vpop.f32.mrf.mxu0
  %v1073 = vadd.f32 %v867, %v1072
  %v1074 = vpop.f32.mrf.mxu0
  %v1075 = vadd.f32 %v871, %v1074
  %1076 = vdwg.mxu0
  %v1077 = vmax.f32 %v1069, 0.0
  %v1078 = vmax.f32 %v1071, 0.0
  %v1079 = vmax.f32 %v1073, 0.0
  %v1080 = vmax.f32 %v1075, 0.0
  %v1081 = vpack.c.bf16 %v1079, %v1077
  %v1082 = vpack.c.bf16 %v1080, %v1078
  %v1083 = vld [vmem:[%s5] sm:$0xf]
  %v1084 = vld [vmem:[%s5 + $0x4] sm:$0xf]
  %v1085 = vld [vmem:[%s5 + $0x8] sm:$0xf]
  %v1086 = vld [vmem:[%s5 + $0xc] sm:$0xf]
  %v1087 = vld [vmem:[%s5 + $0x10] sm:$0xf]
  %v1088 = vld [vmem:[%s5 + $0x14] sm:$0xf]
  %v1089 = vld [vmem:[%s5 + $0x18] sm:$0xf]
  %v1090 = vld [vmem:[%s5 + $0x1c] sm:$0xf]
  %v1091 = vld [vmem:[%s5 + $0x20] sm:$0xf]
  %v1092 = vld [vmem:[%s5 + $0x24] sm:$0xf]
  %v1093 = vld [vmem:[%s5 + $0x28] sm:$0xf]
  %v1094 = vld [vmem:[%s5 + $0x2c] sm:$0xf]
  %v1095 = vld [vmem:[%s5 + $0x30] sm:$0xf]
  %v1096 = vld [vmem:[%s5 + $0x34] sm:$0xf]
  %v1097 = vld [vmem:[%s5 + $0x38] sm:$0xf]
  %v1098 = vld [vmem:[%s5 + $0x3c] sm:$0xf]
  %v1099 = vld [vmem:[%s5 + $0x40] sm:$0xf]
  %v1100 = vld [vmem:[%s5 + $0x44] sm:$0xf]
  %v1101 = vld [vmem:[%s5 + $0x48] sm:$0xf]
  %v1102 = vld [vmem:[%s5 + $0x4c] sm:$0xf]
  %v1103 = vld [vmem:[%s5 + $0x50] sm:$0xf]
  %v1104 = vld [vmem:[%s5 + $0x54] sm:$0xf]
  %v1105 = vld [vmem:[%s5 + $0x58] sm:$0xf]
  %v1106 = vld [vmem:[%s5 + $0x5c] sm:$0xf]
  %v1107 = vld [vmem:[%s5 + $0x60] sm:$0xf]
  %v1108 = vld [vmem:[%s5 + $0x64] sm:$0xf]
  %v1109 = vld [vmem:[%s5 + $0x68] sm:$0xf]
  %v1110 = vld [vmem:[%s5 + $0x6c] sm:$0xf]
  %v1111 = vld [vmem:[%s5 + $0x70] sm:$0xf]
  %v1112 = vld [vmem:[%s5 + $0x74] sm:$0xf]
  %v1113 = vld [vmem:[%s5 + $0x78] sm:$0xf]
  %v1114 = vld [vmem:[%s5 + $0x7c] sm:$0xf]
  %v1115 = vld [vmem:[%s6] sm:$0x1]
  %v1117 = vlaneseq
  %v1118 = vshrl.u32 %v1117, 7
  %v1119 = vsub.s32 0, %v1118
  %v1120 = vrot.slane %v1115, %v1119
  %v1154 = vunpack.c.l.b16 %v1083
  %v1155 = vunpack.c.l.b16 %v1084
  %v1156 = vunpack.c.l.b16 %v1085
  %v1157 = vunpack.c.l.b16 %v1086
  %v1158 = vunpack.c.l.b16 %v1087
  %v1159 = vunpack.c.l.b16 %v1088
  %v1160 = vunpack.c.l.b16 %v1089
  %v1161 = vunpack.c.l.b16 %v1090
  %v1162 = vunpack.c.l.b16 %v1091
  %v1163 = vunpack.c.l.b16 %v1092
  %v1164 = vunpack.c.l.b16 %v1093
  %v1165 = vunpack.c.l.b16 %v1094
  %v1166 = vunpack.c.l.b16 %v1095
  %v1167 = vunpack.c.l.b16 %v1096
  %v1168 = vunpack.c.l.b16 %v1097
  %v1169 = vunpack.c.l.b16 %v1098
  %v1170 = vunpack.c.l.b16 %v1099
  %v1171 = vunpack.c.l.b16 %v1100
  %v1172 = vunpack.c.l.b16 %v1101
  %v1173 = vunpack.c.l.b16 %v1102
  %v1174 = vunpack.c.l.b16 %v1103
  %v1175 = vunpack.c.l.b16 %v1104
  %v1176 = vunpack.c.l.b16 %v1105
  %v1177 = vunpack.c.l.b16 %v1106
  %v1178 = vunpack.c.l.b16 %v1107
  %v1179 = vunpack.c.l.b16 %v1108
  %v1180 = vunpack.c.l.b16 %v1109
  %v1181 = vunpack.c.l.b16 %v1110
  %v1182 = vunpack.c.l.b16 %v1111
  %v1183 = vunpack.c.l.b16 %v1112
  %v1184 = vunpack.c.l.b16 %v1113
  %v1185 = vunpack.c.l.b16 %v1114
  %v1186 = vpack.c.b16 %v1155, %v1154
  %v1187 = vpack.c.b16 %v1157, %v1156
  %v1188 = vpack.c.b16 %v1159, %v1158
  %v1189 = vpack.c.b16 %v1161, %v1160
  %v1190 = vpack.c.b16 %v1163, %v1162
  %v1191 = vpack.c.b16 %v1165, %v1164
  %v1192 = vpack.c.b16 %v1167, %v1166
  %v1193 = vpack.c.b16 %v1169, %v1168
  %v1194 = vpack.c.b16 %v1171, %v1170
  %v1195 = vpack.c.b16 %v1173, %v1172
  %v1196 = vpack.c.b16 %v1175, %v1174
  %v1197 = vpack.c.b16 %v1177, %v1176
  %v1198 = vpack.c.b16 %v1179, %v1178
  %v1199 = vpack.c.b16 %v1181, %v1180
  %v1200 = vpack.c.b16 %v1183, %v1182
  %v1201 = vpack.c.b16 %v1185, %v1184
  %1218 = vmatprep.subr.bf16.mxu0 0
  %1219 = vmatpush1.bf16.msra.mxu0 %v1193
  %1220 = vmatprep.subr.bf16.mxu0 0
  %1221 = vmatpush1.bf16.msra.mxu0 %v1192
  %1222 = vmatprep.subr.bf16.mxu0 0
  %1223 = vmatpush1.bf16.msra.mxu0 %v1191
  %1224 = vmatprep.subr.bf16.mxu0 0
  %1225 = vmatpush1.bf16.msra.mxu0 %v1190
  %1226 = vmatprep.subr.bf16.mxu0 0
  %1227 = vmatpush1.bf16.msra.mxu0 %v1189
  %1228 = vmatprep.subr.bf16.mxu0 0
  %1229 = vmatpush1.bf16.msra.mxu0 %v1188
  %1230 = vmatprep.subr.bf16.mxu0 0
  %1231 = vmatpush1.bf16.msra.mxu0 %v1187
  %1232 = vmatprep.subr.bf16.mxu0 0
  %1233 = vmatpush1.bf16.msra.mxu0 %v1186
  %1234 = vmatprep.subr.bf16.mxu0 0
  %1235 = vmatpush2.bf16.msra.mxu0 %v1201
  %1236 = vmatprep.subr.bf16.mxu0 0
  %1237 = vmatpush2.bf16.msra.mxu0 %v1200
  %1238 = vmatprep.subr.bf16.mxu0 0
  %1239 = vmatpush2.bf16.msra.mxu0 %v1199
  %1240 = vmatprep.subr.bf16.mxu0 0
  %1241 = vmatpush2.bf16.msra.mxu0 %v1198
  %1242 = vmatprep.subr.bf16.mxu0 0
  %1243 = vmatpush2.bf16.msra.mxu0 %v1197
  %1244 = vmatprep.subr.bf16.mxu0 0
  %1245 = vmatpush2.bf16.msra.mxu0 %v1196
  %1246 = vmatprep.subr.bf16.mxu0 0
  %1247 = vmatpush2.bf16.msra.mxu0 %v1195
  %1248 = vmatprep.subr.bf16.mxu0 0
  %1249 = vmatpush2.bf16.msra.mxu0 %v1194
  %1250 = vmatprep.mubr.bf16.mxu0 %v1082
  %1251 = vmatmul.mubr.bf16.gmra.mxu0 %v1081
  %v1252 = vpop.f32.mrf.mxu0
  %v1253 = vadd.f32 %v1120, %v1252
  %v1254 = vpop.f32.mrf.mxu0
  %v1255 = vpop.f32.mrf.mxu0
  %v1256 = vadd.f32 %v1120, %v1255
  %v1257 = vpop.f32.mrf.mxu0
  %1258 = vdwg.mxu0
  %v1259 = vpack.c.bf16 %v1256, %v1253
  %v1261 = vunpack.c.l.b16 %v1259
  %v1262 = vunpack.c.h.b16 %v1259
  %v1263 = vpack.c.b16 %v1261, %v1261
  %v1264 = vpack.c.b16 %v1262, %v1262
  %1267 = vst [vmem:[%s7] sm:$0xf] %v1263
  %1268 = vst [vmem:[%s7 + $0x4] sm:$0xf] %v1264
  // Predicated region
  $region30: #{mnist_2nn_forward.1} parent=0 // pred_check
    _
  $region31: #{mnist_2nn_forward.1} parent=0 // pred_check_branch
    %1270 = sbr.rel (0) target = $region33
  $region32: #{mnist_2nn_forward.1} parent=0 // pred_region
    _
  $region33: #{mnist_2nn_forward.1} parent=0 // pred_fallthru
    _
  // Predicated region
  $region34: #{mnist_2nn_forward.1} parent=0 // pred_check
    _
  $region35: #{mnist_2nn_forward.1} parent=0 // pred_check_branch
    %1272 = sbr.rel (0) target = $region37
  $region36: #{mnist_2nn_forward.1} parent=0 // pred_region
    _
  $region37: #{mnist_2nn_forward.1} parent=0 // pred_fallthru
    _

</llo_original>
